<compile_context>
chip_gen: v6e
topology: v6e:2x2x1
jax: 0.10.0
libtpu: 0.0.40
codegen_flags: <defaults>
</compile_context>

<pallas_src>
import functools
import math

import jax
import jax.numpy as jnp
from jax.experimental import pallas as pl
from jax.experimental.pallas import tpu as pltpu

LANES = 128        # vreg lane width  -> theta (minor) axis
SUBLANES = 8       # vreg sublane width -> phi (major) axis
MAX_TILE_I = 256   # phi rows per tile
MAX_TILE_J = 1024  # theta lanes per tile (multiple of 128)
TARGET_GRID = 8    # aim for >= this many grid steps (v7x megacore sharding)


def _round_up(x, m):
    return ((x + m - 1) // m) * m


def _cdiv(a, b):
    return -(-a // b)


# ----------------------------------------------------------------------------
# Host-side helpers mirroring the undefined PyTorch helpers.
# ----------------------------------------------------------------------------
def make_phi_theta(n):
    """Meshgrid of azimuth phi in [-pi, pi] and polar theta in [-pi/2, pi/2].

    Uses the explicit start + i*step form so it matches the in-kernel
    generation exactly.
    """
    i = jnp.arange(n, dtype=jnp.float32)
    phi = (-math.pi) + i * (2.0 * math.pi / (n - 1))
    theta = (-math.pi / 2.0) + i * (math.pi / (n - 1))
    pp, tt = jnp.meshgrid(phi, theta, indexing="ij")
    return pp.reshape(-1), tt.reshape(-1)


def make_cube_faces(n):
    """Triangulate the n x n parameter grid (two triangles per quad)."""
    idx = jnp.arange(n * n, dtype=jnp.int32).reshape(n, n)
    v00 = idx[: n - 1, : n - 1].reshape(-1)
    v01 = idx[: n - 1, 1:].reshape(-1)
    v10 = idx[1:, : n - 1].reshape(-1)
    v11 = idx[1:, 1:].reshape(-1)
    tri_a = jnp.stack([v00, v01, v11], axis=1)
    tri_b = jnp.stack([v00, v11, v10], axis=1)
    return jnp.concatenate([tri_a, tri_b], axis=0).astype(jnp.int32)


def to_vertices(xyz):
    # TODO(synk): `to_vertices` is not defined in the reference source; assumed
    # to be an identity pass-through on the (N, 3) vertex array.
    return xyz


# ----------------------------------------------------------------------------
# Pallas kernel: separable superformula + spherical product.
# ----------------------------------------------------------------------------
def _supershape_kernel(params_ref, xyz_ref, *, tile_i, tile_j,
                       phi_start, phi_step, theta_start, theta_step):
    # params_ref (SMEM): [m/4, 1/a, 1/b, -1/n1, n2, n3]
    m4 = params_ref[0]
    inv_a = params_ref[1]
    inv_b = params_ref[2]
    neg_inv_n1 = params_ref[3]
    n2 = params_ref[4]
    n3 = params_ref[5]

    i0 = pl.program_id(0) * tile_i      # phi   tile offset (sublane axis)
    j0 = pl.program_id(1) * tile_j      # theta tile offset (lane axis)

    # Per-axis angle vectors regenerated in-kernel (no input DMA, no flat-index
    # divide/mod).  phi is a sublane column, theta a lane row.
    i_idx = i0 + jax.lax.broadcasted_iota(jnp.int32, (tile_i, 1), 0)
    j_idx = j0 + jax.lax.broadcasted_iota(jnp.int32, (1, tile_j), 1)
    phi = phi_start + i_idx.astype(jnp.float32) * phi_step        # (tile_i, 1)
    theta = theta_start + j_idx.astype(jnp.float32) * theta_step  # (1, tile_j)

    def get_radius(angle):
        t = angle * m4
        term1 = jnp.power(jnp.abs(jnp.cos(t) * inv_a), n2)
        term2 = jnp.power(jnp.abs(jnp.sin(t) * inv_b), n3)
        return jnp.power(term1 + term2, neg_inv_n1)

    # All transcendentals are O(tile_i + tile_j), NOT O(tile_i * tile_j):
    # evaluated once per tile on the column / row vectors.
    r1 = get_radius(phi)        # (tile_i, 1)
    r2 = get_radius(theta)      # (1, tile_j)

    col_x = r1 * jnp.cos(phi)   # (tile_i, 1)   r1 * cos(phi)
    col_y = r1 * jnp.sin(phi)   # (tile_i, 1)   r1 * sin(phi)
    row_xy = r2 * jnp.sin(theta)  # (1, tile_j)  r2 * sin(theta)
    row_z = r2 * jnp.cos(theta)   # (1, tile_j)  r2 * cos(theta)

    # Dense tiles are pure broadcast-multiplies (VPU) + lane-dense stores.
    xyz_ref[0] = col_x * row_xy                                   # x
    xyz_ref[1] = col_y * row_xy                                   # y
    xyz_ref[2] = jnp.broadcast_to(row_z, (tile_i, tile_j))        # z


def _choose_tiles(n):
    """Pick (tile_i, tile_j, NI, NJ, grid_i, grid_j).

    tile_j is a multiple of 128, tile_i a multiple of 8, tiles divide the
    padded extents exactly, the double-buffered output tile stays <= ~6 MiB,
    and (when the problem is big enough) there are >= TARGET_GRID grid steps
    so v7x's two TensorCores both get work.
    """
    tile_j = min(_round_up(n, LANES), MAX_TILE_J)
    nj = _round_up(n, tile_j)
    grid_j = nj // tile_j

    tile_i = min(_round_up(n, SUBLANES), MAX_TILE_I)
    want_i = max(1, _cdiv(TARGET_GRID, grid_j))
    cap_i = _round_up(_cdiv(_round_up(n, SUBLANES), want_i), SUBLANES)
    tile_i = max(SUBLANES, min(tile_i, cap_i))
    ni = _round_up(n, tile_i)
    grid_i = ni // tile_i
    return tile_i, tile_j, ni, nj, grid_i, grid_j


@functools.partial(jax.jit, static_argnames=("n",))
def supershape_forward(params, n):
    """params: (6,) f32 array [m, a, b, n1, n2, n3].  Returns (vert, faces)."""
    tile_i, tile_j, ni, nj, grid_i, grid_j = _choose_tiles(n)

    phi_start = -math.pi
    phi_step = 2.0 * math.pi / (n - 1)
    theta_start = -math.pi / 2.0
    theta_step = math.pi / (n - 1)

    # Derive reciprocal constants once: strips per-element divides and keeps
    # only the 6 scalars in SMEM.
    m, a, b, n1, n2, n3 = (params[q] for q in range(6))
    derived = jnp.stack(
        [m * 0.25, 1.0 / a, 1.0 / b, -1.0 / n1, n2, n3]).astype(jnp.float32)

    kernel = functools.partial(
        _supershape_kernel, tile_i=tile_i, tile_j=tile_j,
        phi_start=phi_start, phi_step=phi_step,
        theta_start=theta_start, theta_step=theta_step)

    xyz = pl.pallas_call(
        kernel,
        out_shape=jax.ShapeDtypeStruct((3, ni, nj), jnp.float32),
        grid=(grid_i, grid_j),
        in_specs=[pl.BlockSpec(memory_space=pltpu.MemorySpace.SMEM)],  # params
        out_specs=pl.BlockSpec((3, tile_i, tile_j), lambda gi, gj: (0, gi, gj)),
        compiler_params=pltpu.CompilerParams(
            dimension_semantics=("parallel", "parallel"),  # shards across TCs
        ),
        cost_estimate=pl.CostEstimate(
            flops=4 * ni * nj,
            transcendentals=20 * (tile_i + tile_j) * grid_i * grid_j,
            bytes_accessed=3 * ni * nj * 4 + 6 * 4,
        ),
    )(derived)

    # Drop padding, flatten i-major (matches meshgrid('ij').reshape(-1)), and
    # interleave to (N, 3) == torch.stack((x, y, z), dim=1).  Under jit this
    # fuses with to_vertices into a single XLA pass; the kernel output itself
    # stays lane-dense.
    flat = xyz[:, :n, :n].reshape(3, n * n)
    vert = to_vertices(jnp.transpose(flat, (1, 0)))
    faces = make_cube_faces(n)
    return vert, faces


if __name__ == "__main__":
    n = 32  # grid resolution -> N = n*n = 1024 vertices

    # Deterministic "learned" parameters (nn.Parameter init values, jittered
    # slightly with PRNGKey(0) so the kernel sees non-trivial values).
    key = jax.random.PRNGKey(0)
    base = jnp.array([2.0, 1.0, 1.0, 1.0, 2.0, 2.0], dtype=jnp.float32)
    jitter = 0.01 * jax.random.normal(key, (6,), dtype=jnp.float32)
    params = base + jitter

    vert, faces = supershape_forward(params, n)
    vert = jax.block_until_ready(vert)
    faces = jax.block_until_ready(faces)

    # Pure-JAX reference check (direct PyTorch translation).
    phi, theta = make_phi_theta(n)

    def ref_radius(angle, m, a, b, n1, n2, n3):
        t = m * angle / 4.0
        return jnp.power(
            jnp.power(jnp.abs(jnp.cos(t) / a), n2)
            + jnp.power(jnp.abs(jnp.sin(t) / b), n3),
            -1.0 / n1,
        )

    m_, a_, b_, n1_, n2_, n3_ = [params[i] for i in range(6)]
    r1 = ref_radius(phi, m_, a_, b_, n1_, n2_, n3_)
    r2 = ref_radius(theta, m_, a_, b_, n1_, n2_, n3_)
    x_ref = r1 * jnp.sin(theta) * r2 * jnp.cos(phi)
    y_ref = r1 * jnp.sin(theta) * r2 * jnp.sin(phi)
    z_ref = r2 * jnp.cos(theta)
    vert_ref = jnp.stack((x_ref, y_ref, z_ref), axis=1)

    assert vert.shape == (n * n, 3) and vert.dtype == jnp.float32
    assert faces.shape == (2 * (n - 1) * (n - 1), 3) and faces.dtype == jnp.int32
    assert jnp.allclose(vert, vert_ref, atol=1e-5, rtol=1e-5)

    print("KERNEL_OK")
</pallas_src>

<mosaic_0001>
module attributes {stable_mosaic.version = 11 : i64} {
  func.func @_supershape_kernel(%arg0: i32, %arg1: i32, %arg2: memref<6xf32, #tpu.memory_space<smem>>, %arg3: memref<3x8x128xf32, #tpu.memory_space<vmem>>) attributes {dimension_semantics = [#tpu.dimension_semantics<parallel>, #tpu.dimension_semantics<parallel>], iteration_bounds = array<i64: 4, 1>, scalar_prefetch = 0 : i64, scratch_operands = 0 : i64, tpu.core_type = #tpu.core_type<tc>, window_params = [{transform_indices = @transform_0, window_bounds = array<i64: 6>}, {transform_indices = @transform_1, window_bounds = array<i64: 3, 8, 128>}]} {
    %c0 = arith.constant 0 : index
    %0 = memref.load %arg2[%c0] : memref<6xf32, #tpu.memory_space<smem>>
    %c1 = arith.constant 1 : index
    %1 = memref.load %arg2[%c1] : memref<6xf32, #tpu.memory_space<smem>>
    %c2 = arith.constant 2 : index
    %2 = memref.load %arg2[%c2] : memref<6xf32, #tpu.memory_space<smem>>
    %c3 = arith.constant 3 : index
    %3 = memref.load %arg2[%c3] : memref<6xf32, #tpu.memory_space<smem>>
    %c4 = arith.constant 4 : index
    %4 = memref.load %arg2[%c4] : memref<6xf32, #tpu.memory_space<smem>>
    %c5 = arith.constant 5 : index
    %5 = memref.load %arg2[%c5] : memref<6xf32, #tpu.memory_space<smem>>
    %c8_i32 = arith.constant 8 : i32
    %6 = arith.muli %arg0, %c8_i32 : i32
    %c128_i32 = arith.constant 128 : i32
    %7 = arith.muli %arg1, %c128_i32 : i32
    %8 = tpu.iota {dimensions = array<i32: 0>} : vector<8x1xi32>
    %9 = vector.broadcast %6 : i32 to vector<8x1xi32>
    %10 = arith.addi %9, %8 : vector<8x1xi32>
    %11 = tpu.iota {dimensions = array<i32: 1>} : vector<1x128xi32>
    %12 = vector.broadcast %7 : i32 to vector<1x128xi32>
    %13 = arith.addi %12, %11 : vector<1x128xi32>
    %14 = arith.sitofp %10 : vector<8x1xi32> to vector<8x1xf32>
    %cst = arith.constant 0.202683404 : f32
    %15 = vector.broadcast %cst : f32 to vector<8x1xf32>
    %16 = arith.mulf %14, %15 : vector<8x1xf32>
    %cst_0 = arith.constant -3.14159274 : f32
    %17 = vector.broadcast %cst_0 : f32 to vector<8x1xf32>
    %18 = arith.addf %17, %16 : vector<8x1xf32>
    %19 = arith.sitofp %13 : vector<1x128xi32> to vector<1x128xf32>
    %cst_1 = arith.constant 0.101341702 : f32
    %20 = vector.broadcast %cst_1 : f32 to vector<1x128xf32>
    %21 = arith.mulf %19, %20 : vector<1x128xf32>
    %cst_2 = arith.constant -1.57079637 : f32
    %22 = vector.broadcast %cst_2 : f32 to vector<1x128xf32>
    %23 = arith.addf %22, %21 : vector<1x128xf32>
    %24 = vector.broadcast %0 : f32 to vector<8x1xf32>
    %25 = arith.mulf %18, %24 : vector<8x1xf32>
    %26 = math.cos %25 : vector<8x1xf32>
    %27 = vector.broadcast %1 : f32 to vector<8x1xf32>
    %28 = arith.mulf %26, %27 : vector<8x1xf32>
    %29 = math.absf %28 : vector<8x1xf32>
    %30 = vector.broadcast %4 : f32 to vector<8x1xf32>
    %31 = math.powf %29, %30 : vector<8x1xf32>
    %32 = math.sin %25 : vector<8x1xf32>
    %33 = vector.broadcast %2 : f32 to vector<8x1xf32>
    %34 = arith.mulf %32, %33 : vector<8x1xf32>
    %35 = math.absf %34 : vector<8x1xf32>
    %36 = vector.broadcast %5 : f32 to vector<8x1xf32>
    %37 = math.powf %35, %36 : vector<8x1xf32>
    %38 = arith.addf %31, %37 : vector<8x1xf32>
    %39 = vector.broadcast %3 : f32 to vector<8x1xf32>
    %40 = math.powf %38, %39 : vector<8x1xf32>
    %41 = vector.broadcast %0 : f32 to vector<1x128xf32>
    %42 = arith.mulf %23, %41 : vector<1x128xf32>
    %43 = math.cos %42 : vector<1x128xf32>
    %44 = vector.broadcast %1 : f32 to vector<1x128xf32>
    %45 = arith.mulf %43, %44 : vector<1x128xf32>
    %46 = math.absf %45 : vector<1x128xf32>
    %47 = vector.broadcast %4 : f32 to vector<1x128xf32>
    %48 = math.powf %46, %47 : vector<1x128xf32>
    %49 = math.sin %42 : vector<1x128xf32>
    %50 = vector.broadcast %2 : f32 to vector<1x128xf32>
    %51 = arith.mulf %49, %50 : vector<1x128xf32>
    %52 = math.absf %51 : vector<1x128xf32>
    %53 = vector.broadcast %5 : f32 to vector<1x128xf32>
    %54 = math.powf %52, %53 : vector<1x128xf32>
    %55 = arith.addf %48, %54 : vector<1x128xf32>
    %56 = vector.broadcast %3 : f32 to vector<1x128xf32>
    %57 = math.powf %55, %56 : vector<1x128xf32>
    %58 = math.cos %18 : vector<8x1xf32>
    %59 = arith.mulf %40, %58 : vector<8x1xf32>
    %60 = math.sin %18 : vector<8x1xf32>
    %61 = arith.mulf %40, %60 : vector<8x1xf32>
    %62 = math.sin %23 : vector<1x128xf32>
    %63 = arith.mulf %57, %62 : vector<1x128xf32>
    %64 = math.cos %23 : vector<1x128xf32>
    %65 = arith.mulf %57, %64 : vector<1x128xf32>
    %66 = vector.broadcast %59 : vector<8x1xf32> to vector<8x128xf32>
    %67 = vector.broadcast %63 : vector<1x128xf32> to vector<8x128xf32>
    %68 = arith.mulf %66, %67 : vector<8x128xf32>
    %c0_3 = arith.constant 0 : index
    %c0_4 = arith.constant 0 : index
    %c0_5 = arith.constant 0 : index
    %69 = vector.load %arg3[%c0_3, %c0_4, %c0_5] : memref<3x8x128xf32, #tpu.memory_space<vmem>>, vector<1x8x128xf32>
    %70 = vector.shape_cast %69 : vector<1x8x128xf32> to vector<8x128xf32>
    %71 = vector.shape_cast %68 : vector<8x128xf32> to vector<1x8x128xf32>
    tpu.vector_store %arg3[%c0_3, %c0_4, %c0_5], %71 {strides = array<i32>} : memref<3x8x128xf32, #tpu.memory_space<vmem>>, vector<1x8x128xf32>,
    %72 = vector.broadcast %61 : vector<8x1xf32> to vector<8x128xf32>
    %73 = vector.broadcast %63 : vector<1x128xf32> to vector<8x128xf32>
    %74 = arith.mulf %72, %73 : vector<8x128xf32>
    %c1_6 = arith.constant 1 : index
    %c0_7 = arith.constant 0 : index
    %c0_8 = arith.constant 0 : index
    %75 = vector.load %arg3[%c1_6, %c0_7, %c0_8] : memref<3x8x128xf32, #tpu.memory_space<vmem>>, vector<1x8x128xf32>
    %76 = vector.shape_cast %75 : vector<1x8x128xf32> to vector<8x128xf32>
    %77 = vector.shape_cast %74 : vector<8x128xf32> to vector<1x8x128xf32>
    tpu.vector_store %arg3[%c1_6, %c0_7, %c0_8], %77 {strides = array<i32>} : memref<3x8x128xf32, #tpu.memory_space<vmem>>, vector<1x8x128xf32>,
    %78 = vector.shape_cast %65 : vector<1x128xf32> to vector<1x128xf32>
    %79 = vector.broadcast %78 : vector<1x128xf32> to vector<8x128xf32>
    %c2_9 = arith.constant 2 : index
    %c0_10 = arith.constant 0 : index
    %c0_11 = arith.constant 0 : index
    %80 = vector.load %arg3[%c2_9, %c0_10, %c0_11] : memref<3x8x128xf32, #tpu.memory_space<vmem>>, vector<1x8x128xf32>
    %81 = vector.shape_cast %80 : vector<1x8x128xf32> to vector<8x128xf32>
    %82 = vector.shape_cast %79 : vector<8x128xf32> to vector<1x8x128xf32>
    tpu.vector_store %arg3[%c2_9, %c0_10, %c0_11], %82 {strides = array<i32>} : memref<3x8x128xf32, #tpu.memory_space<vmem>>, vector<1x8x128xf32>,
    return
  }
  func.func @transform_0(%arg0: i32, %arg1: i32) -> i32 {
    %c0_i32 = arith.constant 0 : i32
    %c0_i32_0 = arith.constant 0 : i32
    return %c0_i32 : i32
  }
  func.func @transform_1(%arg0: i32, %arg1: i32) -> (i32, i32, i32) {
    %c0_i32 = arith.constant 0 : i32
    %c0_i32_0 = arith.constant 0 : i32
    return %c0_i32, %arg0, %arg1 : i32, i32, i32
  }
}

</mosaic_0001>

<llo_original>
// kernel: supershape_forward.1
$region0: #{supershape_forward.1}
  #allocation0 [shape = 'u32[]', space=smem, size = 0x4, offset = 0x4, fixed_abs, tag = 'smem constant byte address 0x4 - core index']
  #allocation1 [shape = 'u32[144,128]{1,0:T(1,128)}', space=vmem, size = 0x12000, scoped, tag = 'internal scratch']
  %s0 = inlined_call_operand.vmem [shape: f32[6], index: 0, kind: input, shape index: {}]
  %s1 = inlined_call_operand.vmem [shape: f32[3,32,128], index: 1, kind: output, shape index: {}]
  %s2 = sld [smem:[#allocation0]]
  $region75: #{supershape_forward.1} parent=0
    _
  %s4 = ssub.s32 1, %s2
  %s5 = scalar_select 0, %s4, %s2
  $region1: #{supershape_forward.1} parent=0
    #allocation2 [shape = 'u8[512]{0}', space=smem, size = 0x200, scoped, tag = 'input window, operand 0, single buffered']
    #allocation3 [shape = 's32[2]{0}', space=sflag, size = 0x8, scoped, tag = 'scoped memory for supershape_forward.1']
    #allocation4 [shape = 'u8[24576]{0}', space=vmem, size = 0x6000, scoped, tag = 'output window, operand 0']
    %6 = vsyncpa [#allocation3], 0
    loop: start=0, step=1, limit=6
    $region2: #{supershape_forward.1} parent=1 // loop_pre_header
      _
    $region3: #{supershape_forward.1} parent=1 // loop_header
      %s8 = sphi 0, %s12
      %p9 = scmp.ge.s32.totalorder %s8, 6
      %s15 = sphi 0, %s27
      %s16 = sphi 0, %s23
      %s17 = sphi 0, %s15
      %s18 = sphi 0, %s16
      %s19 = sphi 0, %s17
      %s20 = sphi 0, %s18
      %s28 = sphi 0, %s28
      %s30 = sphi 0, %s28
      %s31 = sphi 0, %s30
      %s45 = sphi 0, %s31
      %s53 = sphi 0, %s55
      %s56 = sphi 0, %s53
      %s57 = sphi 0, %s56
      %s73 = sphi 0, %s57
    $region4: #{supershape_forward.1} parent=1 // loop_header_branch
      %11 = sbr.rel (%p9) target = $region8
    $region5: #{supershape_forward.1} parent=1 // loop_body
      %s13 = ssub.s32 %s8, 1
      %s14 = ssub.s32 %s8, 2
      %s21 = sadd.s32 1, %s16
      %p22 = scmp.ge.s32.totalorder %s21, 1
      %s23 = scalar_select %p22, 0, %s21
      %s24 = sadd.s32 1, %s15
      %s25 = scalar_select %p22, %s24, %s15
      %p26 = scmp.ge.s32.totalorder %s25, 4
      %s27 = scalar_select %p26, 0, %s25
      %s29 = sadd.s32 %s28, 1
      %p32 = scmp.eq.s32.totalorder %s8, 3
      %p33 = scmp.ne.s32.totalorder %s28, %s30
      %p34 = scmp.eq.s32.totalorder %s8, 0
      %p35 = por %p33, %p34
      %p36 = scmp.ne.s32.totalorder %s28, %s30
      %p37 = scmp.eq.s32.totalorder %s13, 3
      %p38 = por %p36, %p37
      %p39 = scmp.ne.s32.totalorder %s30, %s31
      %p40 = scmp.eq.s32.totalorder %s13, 0
      %p41 = por %p39, %p40
      %p42 = scmp.ne.s32.totalorder %s30, %s31
      %p43 = scmp.eq.s32.totalorder %s14, 3
      %p44 = por %p42, %p43
      %p46 = scmp.ne.s32.totalorder %s31, %s45
      %p47 = scmp.eq.s32.totalorder %s14, 0
      %p48 = por %p46, %p47
      %s49 = ssub.s32 %s15, %s27
      %s50 = ssub.s32 %s16, %s23
      %s51 = sor.u32 %s49, %s50
      %p52 = scmp.eq.s32.totalorder %s51, 0
      %s54 = sadd.s32 %s53, 1
      %s55 = scalar_select %p52, %s53, %s54
      %p58 = pneg %p52
      %p59 = scmp.eq.s32.totalorder %s8, 3
      %p60 = por %p58, %p59
      %p61 = scmp.ne.s32.totalorder %s53, %s56
      %p62 = scmp.eq.s32.totalorder %s8, 0
      %p63 = por %p61, %p62
      %p64 = scmp.ne.s32.totalorder %s53, %s56
      %p65 = scmp.eq.s32.totalorder %s13, 3
      %p66 = por %p64, %p65
      %p67 = scmp.ne.s32.totalorder %s56, %s57
      %p68 = scmp.eq.s32.totalorder %s13, 0
      %p69 = por %p67, %p68
      %p70 = scmp.ne.s32.totalorder %s56, %s57
      %p71 = scmp.eq.s32.totalorder %s14, 3
      %p72 = por %p70, %p71
      %p74 = scmp.ne.s32.totalorder %s57, %s73
      %p75 = scmp.eq.s32.totalorder %s14, 0
      %p76 = por %p74, %p75
      %p77 = scmp.le.s32.totalorder 1, %s8
      %p78 = scmp.lt.s32.totalorder %s8, 5
      %p79 = pnand %p77, %p78
      %p80 = pneg %p79
      // Predicated region
      $region9: #{supershape_forward.1} parent=5 // pred_check
        _
      $region10: #{supershape_forward.1} parent=5 // pred_check_branch
        %82 = sbr.rel (%p79) target = $region12
      $region11: #{supershape_forward.1} parent=5 // pred_region
        %s83 = ssub.s32 %s8, 1
        // Predicated region
        $region13: #{supershape_forward.1} parent=11 // pred_check
          %p84 = pneg %p41
        $region14: #{supershape_forward.1} parent=11 // pred_check_branch
          %86 = sbr.rel (%p84) target = $region16
        $region15: #{supershape_forward.1} parent=11 // pred_region
          %s88 = ssub.s32 16, 16
          %89 = vsyncadd [#allocation3], %s88
          %s91 = sshll.u32 %s0, 4
          %s92 = int_to_ptr.vmem [resolvable:$true] %s91
          %94 = dma.vmem_to_smem %s92, 16, [#allocation2], [#allocation3]
        $region16: #{supershape_forward.1} parent=11 // pred_fallthru
          _
      $region12: #{supershape_forward.1} parent=5 // pred_fallthru
        _
      %p95 = scmp.lt.s32.totalorder %s8, 4
      // Predicated region
      $region17: #{supershape_forward.1} parent=5 // pred_check
        %p96 = pneg %p95
      $region18: #{supershape_forward.1} parent=5 // pred_check_branch
        %98 = sbr.rel (%p96) target = $region20
      $region19: #{supershape_forward.1} parent=5 // pred_region
        _
      $region20: #{supershape_forward.1} parent=5 // pred_fallthru
        _
      %p99 = scmp.le.s32.totalorder 1, %s8
      %p100 = scmp.lt.s32.totalorder %s8, 5
      %p101 = pnand %p99, %p100
      %p102 = pneg %p101
      // Predicated region
      $region21: #{supershape_forward.1} parent=5 // pred_check
        _
      $region22: #{supershape_forward.1} parent=5 // pred_check_branch
        %104 = sbr.rel (%p101) target = $region24
      $region23: #{supershape_forward.1} parent=5 // pred_region
        %s105 = ssub.s32 %s8, 1
        // Predicated region
        $region25: #{supershape_forward.1} parent=23 // pred_check
          %p106 = pneg %p41
        $region26: #{supershape_forward.1} parent=23 // pred_check_branch
          %108 = sbr.rel (%p106) target = $region28
        $region27: #{supershape_forward.1} parent=23 // pred_region
          %109 = dma.done [#allocation3], 16
        $region28: #{supershape_forward.1} parent=23 // pred_fallthru
          _
        %110 = sfence
        %p111 = pneg %p41
        %p112 = pneg %p38
        %p113 = pneg %p69
        %p114 = pneg %p66
        %s115 = sand.u32 %s56, 1
        %s116 = sand.u32 %s56, 1
        %s117 = smul.addr %s116, 24
        %s118 = scalar_lea.vmem [#allocation4], %s117
        %s119 = sld [smem:[#allocation2]]
        %s120 = sld [smem:[#allocation2 + $0x1]]
        %s121 = sld [smem:[#allocation2 + $0x2]]
        %s122 = sld [smem:[#allocation2 + $0x3]]
        %s123 = sld [smem:[#allocation2 + $0x4]]
        %s124 = sld [smem:[#allocation2 + $0x5]]
        %s125 = smul.u32 %s17, 8
        %s126 = smul.u32 %s18, 128
        %v127 = vlaneseq
        %v128 = vshrl.u32 %v127, 7
        %v129 = vstv %s125
        %v130 = vadd.s32 %v129, %v128
        %v131 = vlaneseq
        %v132 = vand.u32 %v131, 127
        %v133 = vstv %s126
        %v134 = vadd.s32 %v133, %v132
        %v135 = vcvt.s32.f32 %v130
        %v136 = vmul.f32 %v135, 0.2026834
        %v137 = vadd.f32 %v136, -3.1415927
        %v138 = vcvt.s32.f32 %v134
        %v139 = vmul.f32 %v138, 0.1013417
        %v140 = vadd.f32 %v139, -1.5707964
        %v141 = vstv %s119
        %v142 = vmul.f32 %v137, %v141
        %v143 = vand.u32 2147483647, %v142
        %vm144 = vcmp.le.f32.partialorder %v143, 0.7853982
        %vm145 = vcmp.lt.s32.totalorder %v142, 0
        %v146 = vand.u32 %v142, 2139095040
        %v147 = vshrl.u32 %v146, 23
        %v148 = vsub.s32 %v147, 127
        %v149 = vand.u32 2147483647, %v142
        %v150 = vand.u32 %v149, 8388607
        %v151 = vor.u32 %v150, 8388608
        %v152 = vsub.s32 0, %v151
        %v153 = vadd.s32 %v148, 1
        %vm154 = vcmp.gt.s32.totalorder %v153, 0
        %v155 = vsel %vm154, %v153, 0
        %v156 = vshrl.u32 %v155, 5
        %v157 = vand.u32 %v155, 31
        %v158 = vsub.s32 32, %v157
        %v159 = vshrl.u32 683565275, %v158
        %v160 = vshll.u32 683565275, %v157
        %v161 = vshrl.u32 2475754826, %v158
        %v162 = vor.u32 %v160, %v161
        %v163 = vshll.u32 2475754826, %v157
        %v164 = vshrl.u32 2131351028, %v158
        %v165 = vor.u32 %v163, %v164
        %v166 = vshll.u32 2131351028, %v157
        %v167 = vshrl.u32 2102212464, %v158
        %v168 = vor.u32 %v166, %v167
        %v169 = vshll.u32 2102212464, %v157
        %v170 = vshrl.u32 920167782, %v158
        %v171 = vor.u32 %v169, %v170
        %v172 = vshll.u32 920167782, %v157
        %v173 = vshrl.u32 1326507024, %v158
        %v174 = vor.u32 %v172, %v173
        %vm175 = vcmp.lt.s32.totalorder %v156, 1
        %vm176 = vcmp.lt.s32.totalorder %v156, 2
        %vm177 = vcmp.lt.s32.totalorder %v156, 3
        %vm178 = vcmp.lt.s32.totalorder %v156, 4
        %v179 = vsel %vm175, %v159, %v162
        %v180 = vsel %vm178, %v168, 2102212464
        %v181 = vsel %vm177, %v165, %v180
        %v182 = vsel %vm176, %v179, %v181
        %v183 = vsel %vm175, %v162, %v165
        %v184 = vsel %vm178, %v171, 920167782
        %v185 = vsel %vm177, %v168, %v184
        %v186 = vsel %vm176, %v183, %v185
        %v187 = vsel %vm175, %v165, %v168
        %v188 = vsel %vm178, %v174, 1326507024
        %v189 = vsel %vm177, %v171, %v188
        %v190 = vsel %vm176, %v187, %v189
        %v191 = vshll.u32 %v151, 8
        %v192 = vmul.u32.u64.compose %v191, %v190
        %v193 = vextract.low.u32 %v192
        %v194 = vextract.high.u32 %v192
        %v195 = vmul.u32.u64.compose %v191, %v186
        %v196 = vextract.low.u32 %v195
        %v197 = vextract.high.u32 %v195
        %v198 = vmul.u32 %v191, %v182
        %v199 = vadd.s32 %v194, %v196
        %vm200 = vc.u32 %v194, %v196
        %v201 = vadd.s32 %v197, 1
        %v202 = vsel %vm200, %v201, %v197
        %v203 = vadd.s32 %v198, %v202
        %v204 = vadd.s32 %v203, 536870912
        %v205 = vshrl.u32 %v204, 30
        %v206 = vshll.u32 %v205, 30
        %v207 = vsub.s32 %v203, %v206
        %vm208 = vcmp.lt.s32.totalorder %v207, 0
        %v209 = vsub.s32 0, %v207
        %v210 = vsel %vm208, %v209, %v207
        %v211 = vclz %v210
        %v212 = vsub.s32 %v211, 2
        %vm213 = vcmp.gt.s32.totalorder 0, %v212
        %v214 = vsel %vm213, 0, %v212
        %v215 = vsub.s32 32, %v214
        %v216 = vshll.u32 %v207, %v214
        %v217 = vshrl.u32 %v199, %v215
        %v218 = vor.u32 %v216, %v217
        %v219 = vsub.s32 4294967266, %v214
        %v220 = vadd.s32 %v219, 127
        %v221 = vshll.u32 %v220, 23
        %v222 = vor.u32 4788187, %v221
        %v223 = vand.u32 2147483647, %v222
        %v225 = vcvt.s32.f32 %v218
        %v226 = vmul.f32 %v225, %v223
        %v227 = vxor.u32 %v226, 2147483648
        %v228 = vsel %vm145, %v227, %v226
        %v229 = vsub.s32 4, %v205
        %v230 = vsel %vm145, %v229, %v205
        %v231 = vsel %vm144, %v142, %v228
        %v232 = vsel %vm144, 0, %v230
        %v233 = vcosq.f32.pop %v231
        %v234 = vsinq.f32.pop %v231
        %vm235 = vweird.f32 %v142
        %v236 = vand.u32 %v232, 3
        %vm237 = vcmp.lt.s32.totalorder %v236, 2
        %vm238 = vcmp.eq.s32.totalorder %v236, 0
        %v239 = vxor.u32 %v234, 2147483648
        %v240 = vsel %vm238, %v233, %v239
        %vm241 = vcmp.eq.s32.totalorder %v236, 2
        %v242 = vxor.u32 %v233, 2147483648
        %v243 = vsel %vm241, %v242, %v234
        %v244 = vsel %vm237, %v240, %v243
        %v245 = vsel %vm235, nan, %v244
        %v246 = vstv %s120
        %v247 = vmul.f32 %v245, %v246
        %v248 = vand.u32 2147483647, %v247
        %v249 = vstv %s123
        %v250 = vpow.f32 %v248, %v249
        %v251 = vand.u32 2147483647, %v142
        %vm252 = vcmp.le.f32.partialorder %v251, 0.7853982
        %vm253 = vcmp.lt.s32.totalorder %v142, 0
        %v254 = vand.u32 %v142, 2139095040
        %v255 = vshrl.u32 %v254, 23
        %v256 = vsub.s32 %v255, 127
        %v257 = vand.u32 2147483647, %v142
        %v258 = vand.u32 %v257, 8388607
        %v259 = vor.u32 %v258, 8388608
        %v260 = vsub.s32 0, %v259
        %v261 = vadd.s32 %v256, 1
        %vm262 = vcmp.gt.s32.totalorder %v261, 0
        %v263 = vsel %vm262, %v261, 0
        %v264 = vshrl.u32 %v263, 5
        %v265 = vand.u32 %v263, 31
        %v266 = vsub.s32 32, %v265
        %v267 = vshrl.u32 683565275, %v266
        %v268 = vshll.u32 683565275, %v265
        %v269 = vshrl.u32 2475754826, %v266
        %v270 = vor.u32 %v268, %v269
        %v271 = vshll.u32 2475754826, %v265
        %v272 = vshrl.u32 2131351028, %v266
        %v273 = vor.u32 %v271, %v272
        %v274 = vshll.u32 2131351028, %v265
        %v275 = vshrl.u32 2102212464, %v266
        %v276 = vor.u32 %v274, %v275
        %v277 = vshll.u32 2102212464, %v265
        %v278 = vshrl.u32 920167782, %v266
        %v279 = vor.u32 %v277, %v278
        %v280 = vshll.u32 920167782, %v265
        %v281 = vshrl.u32 1326507024, %v266
        %v282 = vor.u32 %v280, %v281
        %vm283 = vcmp.lt.s32.totalorder %v264, 1
        %vm284 = vcmp.lt.s32.totalorder %v264, 2
        %vm285 = vcmp.lt.s32.totalorder %v264, 3
        %vm286 = vcmp.lt.s32.totalorder %v264, 4
        %v287 = vsel %vm283, %v267, %v270
        %v288 = vsel %vm286, %v276, 2102212464
        %v289 = vsel %vm285, %v273, %v288
        %v290 = vsel %vm284, %v287, %v289
        %v291 = vsel %vm283, %v270, %v273
        %v292 = vsel %vm286, %v279, 920167782
        %v293 = vsel %vm285, %v276, %v292
        %v294 = vsel %vm284, %v291, %v293
        %v295 = vsel %vm283, %v273, %v276
        %v296 = vsel %vm286, %v282, 1326507024
        %v297 = vsel %vm285, %v279, %v296
        %v298 = vsel %vm284, %v295, %v297
        %v299 = vshll.u32 %v259, 8
        %v300 = vmul.u32.u64.compose %v299, %v298
        %v301 = vextract.low.u32 %v300
        %v302 = vextract.high.u32 %v300
        %v303 = vmul.u32.u64.compose %v299, %v294
        %v304 = vextract.low.u32 %v303
        %v305 = vextract.high.u32 %v303
        %v306 = vmul.u32 %v299, %v290
        %v307 = vadd.s32 %v302, %v304
        %vm308 = vc.u32 %v302, %v304
        %v309 = vadd.s32 %v305, 1
        %v310 = vsel %vm308, %v309, %v305
        %v311 = vadd.s32 %v306, %v310
        %v312 = vadd.s32 %v311, 536870912
        %v313 = vshrl.u32 %v312, 30
        %v314 = vshll.u32 %v313, 30
        %v315 = vsub.s32 %v311, %v314
        %vm316 = vcmp.lt.s32.totalorder %v315, 0
        %v317 = vsub.s32 0, %v315
        %v318 = vsel %vm316, %v317, %v315
        %v319 = vclz %v318
        %v320 = vsub.s32 %v319, 2
        %vm321 = vcmp.gt.s32.totalorder 0, %v320
        %v322 = vsel %vm321, 0, %v320
        %v323 = vsub.s32 32, %v322
        %v324 = vshll.u32 %v315, %v322
        %v325 = vshrl.u32 %v307, %v323
        %v326 = vor.u32 %v324, %v325
        %v327 = vsub.s32 4294967266, %v322
        %v328 = vadd.s32 %v327, 127
        %v329 = vshll.u32 %v328, 23
        %v330 = vor.u32 4788187, %v329
        %v331 = vand.u32 2147483647, %v330
        %v333 = vcvt.s32.f32 %v326
        %v334 = vmul.f32 %v333, %v331
        %v335 = vxor.u32 %v334, 2147483648
        %v336 = vsel %vm253, %v335, %v334
        %v337 = vsub.s32 4, %v313
        %v338 = vsel %vm253, %v337, %v313
        %v339 = vsel %vm252, %v142, %v336
        %v340 = vsel %vm252, 0, %v338
        %v341 = vcosq.f32.pop %v339
        %v342 = vsinq.f32.pop %v339
        %vm343 = vweird.f32 %v142
        %v344 = vadd.s32 %v340, 3
        %v345 = vand.u32 %v344, 3
        %vm346 = vcmp.lt.s32.totalorder %v345, 2
        %vm347 = vcmp.eq.s32.totalorder %v345, 0
        %v348 = vxor.u32 %v342, 2147483648
        %v349 = vsel %vm347, %v341, %v348
        %vm350 = vcmp.eq.s32.totalorder %v345, 2
        %v351 = vxor.u32 %v341, 2147483648
        %v352 = vsel %vm350, %v351, %v342
        %v353 = vsel %vm346, %v349, %v352
        %v354 = vsel %vm343, nan, %v353
        %v355 = vstv %s121
        %v356 = vmul.f32 %v354, %v355
        %v357 = vand.u32 2147483647, %v356
        %v358 = vstv %s124
        %v359 = vpow.f32 %v357, %v358
        %v360 = vadd.f32 %v250, %v359
        %v361 = vstv %s122
        %v362 = vpow.f32 %v360, %v361
        %v363 = vmul.f32 %v140, %v141
        %v364 = vand.u32 2147483647, %v363
        %vm365 = vcmp.le.f32.partialorder %v364, 0.7853982
        %vm366 = vcmp.lt.s32.totalorder %v363, 0
        %v367 = vand.u32 %v363, 2139095040
        %v368 = vshrl.u32 %v367, 23
        %v369 = vsub.s32 %v368, 127
        %v370 = vand.u32 2147483647, %v363
        %v371 = vand.u32 %v370, 8388607
        %v372 = vor.u32 %v371, 8388608
        %v373 = vsub.s32 0, %v372
        %v374 = vadd.s32 %v369, 1
        %vm375 = vcmp.gt.s32.totalorder %v374, 0
        %v376 = vsel %vm375, %v374, 0
        %v377 = vshrl.u32 %v376, 5
        %v378 = vand.u32 %v376, 31
        %v379 = vsub.s32 32, %v378
        %v380 = vshrl.u32 683565275, %v379
        %v381 = vshll.u32 683565275, %v378
        %v382 = vshrl.u32 2475754826, %v379
        %v383 = vor.u32 %v381, %v382
        %v384 = vshll.u32 2475754826, %v378
        %v385 = vshrl.u32 2131351028, %v379
        %v386 = vor.u32 %v384, %v385
        %v387 = vshll.u32 2131351028, %v378
        %v388 = vshrl.u32 2102212464, %v379
        %v389 = vor.u32 %v387, %v388
        %v390 = vshll.u32 2102212464, %v378
        %v391 = vshrl.u32 920167782, %v379
        %v392 = vor.u32 %v390, %v391
        %v393 = vshll.u32 920167782, %v378
        %v394 = vshrl.u32 1326507024, %v379
        %v395 = vor.u32 %v393, %v394
        %vm396 = vcmp.lt.s32.totalorder %v377, 1
        %vm397 = vcmp.lt.s32.totalorder %v377, 2
        %vm398 = vcmp.lt.s32.totalorder %v377, 3
        %vm399 = vcmp.lt.s32.totalorder %v377, 4
        %v400 = vsel %vm396, %v380, %v383
        %v401 = vsel %vm399, %v389, 2102212464
        %v402 = vsel %vm398, %v386, %v401
        %v403 = vsel %vm397, %v400, %v402
        %v404 = vsel %vm396, %v383, %v386
        %v405 = vsel %vm399, %v392, 920167782
        %v406 = vsel %vm398, %v389, %v405
        %v407 = vsel %vm397, %v404, %v406
        %v408 = vsel %vm396, %v386, %v389
        %v409 = vsel %vm399, %v395, 1326507024
        %v410 = vsel %vm398, %v392, %v409
        %v411 = vsel %vm397, %v408, %v410
        %v412 = vshll.u32 %v372, 8
        %v413 = vmul.u32.u64.compose %v412, %v411
        %v414 = vextract.low.u32 %v413
        %v415 = vextract.high.u32 %v413
        %v416 = vmul.u32.u64.compose %v412, %v407
        %v417 = vextract.low.u32 %v416
        %v418 = vextract.high.u32 %v416
        %v419 = vmul.u32 %v412, %v403
        %v420 = vadd.s32 %v415, %v417
        %vm421 = vc.u32 %v415, %v417
        %v422 = vadd.s32 %v418, 1
        %v423 = vsel %vm421, %v422, %v418
        %v424 = vadd.s32 %v419, %v423
        %v425 = vadd.s32 %v424, 536870912
        %v426 = vshrl.u32 %v425, 30
        %v427 = vshll.u32 %v426, 30
        %v428 = vsub.s32 %v424, %v427
        %vm429 = vcmp.lt.s32.totalorder %v428, 0
        %v430 = vsub.s32 0, %v428
        %v431 = vsel %vm429, %v430, %v428
        %v432 = vclz %v431
        %v433 = vsub.s32 %v432, 2
        %vm434 = vcmp.gt.s32.totalorder 0, %v433
        %v435 = vsel %vm434, 0, %v433
        %v436 = vsub.s32 32, %v435
        %v437 = vshll.u32 %v428, %v435
        %v438 = vshrl.u32 %v420, %v436
        %v439 = vor.u32 %v437, %v438
        %v440 = vsub.s32 4294967266, %v435
        %v441 = vadd.s32 %v440, 127
        %v442 = vshll.u32 %v441, 23
        %v443 = vor.u32 4788187, %v442
        %v444 = vand.u32 2147483647, %v443
        %v446 = vcvt.s32.f32 %v439
        %v447 = vmul.f32 %v446, %v444
        %v448 = vxor.u32 %v447, 2147483648
        %v449 = vsel %vm366, %v448, %v447
        %v450 = vsub.s32 4, %v426
        %v451 = vsel %vm366, %v450, %v426
        %v452 = vsel %vm365, %v363, %v449
        %v453 = vsel %vm365, 0, %v451
        %v454 = vcosq.f32.pop %v452
        %v455 = vsinq.f32.pop %v452
        %vm456 = vweird.f32 %v363
        %v457 = vand.u32 %v453, 3
        %vm458 = vcmp.lt.s32.totalorder %v457, 2
        %vm459 = vcmp.eq.s32.totalorder %v457, 0
        %v460 = vxor.u32 %v455, 2147483648
        %v461 = vsel %vm459, %v454, %v460
        %vm462 = vcmp.eq.s32.totalorder %v457, 2
        %v463 = vxor.u32 %v454, 2147483648
        %v464 = vsel %vm462, %v463, %v455
        %v465 = vsel %vm458, %v461, %v464
        %v466 = vsel %vm456, nan, %v465
        %v467 = vmul.f32 %v466, %v246
        %v468 = vand.u32 2147483647, %v467
        %v469 = vpow.f32 %v468, %v249
        %v470 = vand.u32 2147483647, %v363
        %vm471 = vcmp.le.f32.partialorder %v470, 0.7853982
        %vm472 = vcmp.lt.s32.totalorder %v363, 0
        %v473 = vand.u32 %v363, 2139095040
        %v474 = vshrl.u32 %v473, 23
        %v475 = vsub.s32 %v474, 127
        %v476 = vand.u32 2147483647, %v363
        %v477 = vand.u32 %v476, 8388607
        %v478 = vor.u32 %v477, 8388608
        %v479 = vsub.s32 0, %v478
        %v480 = vadd.s32 %v475, 1
        %vm481 = vcmp.gt.s32.totalorder %v480, 0
        %v482 = vsel %vm481, %v480, 0
        %v483 = vshrl.u32 %v482, 5
        %v484 = vand.u32 %v482, 31
        %v485 = vsub.s32 32, %v484
        %v486 = vshrl.u32 683565275, %v485
        %v487 = vshll.u32 683565275, %v484
        %v488 = vshrl.u32 2475754826, %v485
        %v489 = vor.u32 %v487, %v488
        %v490 = vshll.u32 2475754826, %v484
        %v491 = vshrl.u32 2131351028, %v485
        %v492 = vor.u32 %v490, %v491
        %v493 = vshll.u32 2131351028, %v484
        %v494 = vshrl.u32 2102212464, %v485
        %v495 = vor.u32 %v493, %v494
        %v496 = vshll.u32 2102212464, %v484
        %v497 = vshrl.u32 920167782, %v485
        %v498 = vor.u32 %v496, %v497
        %v499 = vshll.u32 920167782, %v484
        %v500 = vshrl.u32 1326507024, %v485
        %v501 = vor.u32 %v499, %v500
        %vm502 = vcmp.lt.s32.totalorder %v483, 1
        %vm503 = vcmp.lt.s32.totalorder %v483, 2
        %vm504 = vcmp.lt.s32.totalorder %v483, 3
        %vm505 = vcmp.lt.s32.totalorder %v483, 4
        %v506 = vsel %vm502, %v486, %v489
        %v507 = vsel %vm505, %v495, 2102212464
        %v508 = vsel %vm504, %v492, %v507
        %v509 = vsel %vm503, %v506, %v508
        %v510 = vsel %vm502, %v489, %v492
        %v511 = vsel %vm505, %v498, 920167782
        %v512 = vsel %vm504, %v495, %v511
        %v513 = vsel %vm503, %v510, %v512
        %v514 = vsel %vm502, %v492, %v495
        %v515 = vsel %vm505, %v501, 1326507024
        %v516 = vsel %vm504, %v498, %v515
        %v517 = vsel %vm503, %v514, %v516
        %v518 = vshll.u32 %v478, 8
        %v519 = vmul.u32.u64.compose %v518, %v517
        %v520 = vextract.low.u32 %v519
        %v521 = vextract.high.u32 %v519
        %v522 = vmul.u32.u64.compose %v518, %v513
        %v523 = vextract.low.u32 %v522
        %v524 = vextract.high.u32 %v522
        %v525 = vmul.u32 %v518, %v509
        %v526 = vadd.s32 %v521, %v523
        %vm527 = vc.u32 %v521, %v523
        %v528 = vadd.s32 %v524, 1
        %v529 = vsel %vm527, %v528, %v524
        %v530 = vadd.s32 %v525, %v529
        %v531 = vadd.s32 %v530, 536870912
        %v532 = vshrl.u32 %v531, 30
        %v533 = vshll.u32 %v532, 30
        %v534 = vsub.s32 %v530, %v533
        %vm535 = vcmp.lt.s32.totalorder %v534, 0
        %v536 = vsub.s32 0, %v534
        %v537 = vsel %vm535, %v536, %v534
        %v538 = vclz %v537
        %v539 = vsub.s32 %v538, 2
        %vm540 = vcmp.gt.s32.totalorder 0, %v539
        %v541 = vsel %vm540, 0, %v539
        %v542 = vsub.s32 32, %v541
        %v543 = vshll.u32 %v534, %v541
        %v544 = vshrl.u32 %v526, %v542
        %v545 = vor.u32 %v543, %v544
        %v546 = vsub.s32 4294967266, %v541
        %v547 = vadd.s32 %v546, 127
        %v548 = vshll.u32 %v547, 23
        %v549 = vor.u32 4788187, %v548
        %v550 = vand.u32 2147483647, %v549
        %v552 = vcvt.s32.f32 %v545
        %v553 = vmul.f32 %v552, %v550
        %v554 = vxor.u32 %v553, 2147483648
        %v555 = vsel %vm472, %v554, %v553
        %v556 = vsub.s32 4, %v532
        %v557 = vsel %vm472, %v556, %v532
        %v558 = vsel %vm471, %v363, %v555
        %v559 = vsel %vm471, 0, %v557
        %v560 = vcosq.f32.pop %v558
        %v561 = vsinq.f32.pop %v558
        %vm562 = vweird.f32 %v363
        %v563 = vadd.s32 %v559, 3
        %v564 = vand.u32 %v563, 3
        %vm565 = vcmp.lt.s32.totalorder %v564, 2
        %vm566 = vcmp.eq.s32.totalorder %v564, 0
        %v567 = vxor.u32 %v561, 2147483648
        %v568 = vsel %vm566, %v560, %v567
        %vm569 = vcmp.eq.s32.totalorder %v564, 2
        %v570 = vxor.u32 %v560, 2147483648
        %v571 = vsel %vm569, %v570, %v561
        %v572 = vsel %vm565, %v568, %v571
        %v573 = vsel %vm562, nan, %v572
        %v574 = vmul.f32 %v573, %v355
        %v575 = vand.u32 2147483647, %v574
        %v576 = vpow.f32 %v575, %v358
        %v577 = vadd.f32 %v469, %v576
        %v578 = vpow.f32 %v577, %v361
        %v579 = vand.u32 2147483647, %v137
        %vm580 = vcmp.le.f32.partialorder %v579, 0.7853982
        %vm581 = vcmp.lt.s32.totalorder %v137, 0
        %v582 = vand.u32 %v137, 2139095040
        %v583 = vshrl.u32 %v582, 23
        %v584 = vsub.s32 %v583, 127
        %v585 = vand.u32 2147483647, %v137
        %v586 = vand.u32 %v585, 8388607
        %v587 = vor.u32 %v586, 8388608
        %v588 = vsub.s32 0, %v587
        %v589 = vadd.s32 %v584, 1
        %vm590 = vcmp.gt.s32.totalorder %v589, 0
        %v591 = vsel %vm590, %v589, 0
        %v592 = vshrl.u32 %v591, 5
        %v593 = vand.u32 %v591, 31
        %v594 = vsub.s32 32, %v593
        %v595 = vshrl.u32 683565275, %v594
        %v596 = vshll.u32 683565275, %v593
        %v597 = vshrl.u32 2475754826, %v594
        %v598 = vor.u32 %v596, %v597
        %v599 = vshll.u32 2475754826, %v593
        %v600 = vshrl.u32 2131351028, %v594
        %v601 = vor.u32 %v599, %v600
        %v602 = vshll.u32 2131351028, %v593
        %v603 = vshrl.u32 2102212464, %v594
        %v604 = vor.u32 %v602, %v603
        %v605 = vshll.u32 2102212464, %v593
        %v606 = vshrl.u32 920167782, %v594
        %v607 = vor.u32 %v605, %v606
        %v608 = vshll.u32 920167782, %v593
        %v609 = vshrl.u32 1326507024, %v594
        %v610 = vor.u32 %v608, %v609
        %vm611 = vcmp.lt.s32.totalorder %v592, 1
        %vm612 = vcmp.lt.s32.totalorder %v592, 2
        %vm613 = vcmp.lt.s32.totalorder %v592, 3
        %vm614 = vcmp.lt.s32.totalorder %v592, 4
        %v615 = vsel %vm611, %v595, %v598
        %v616 = vsel %vm614, %v604, 2102212464
        %v617 = vsel %vm613, %v601, %v616
        %v618 = vsel %vm612, %v615, %v617
        %v619 = vsel %vm611, %v598, %v601
        %v620 = vsel %vm614, %v607, 920167782
        %v621 = vsel %vm613, %v604, %v620
        %v622 = vsel %vm612, %v619, %v621
        %v623 = vsel %vm611, %v601, %v604
        %v624 = vsel %vm614, %v610, 1326507024
        %v625 = vsel %vm613, %v607, %v624
        %v626 = vsel %vm612, %v623, %v625
        %v627 = vshll.u32 %v587, 8
        %v628 = vmul.u32.u64.compose %v627, %v626
        %v629 = vextract.low.u32 %v628
        %v630 = vextract.high.u32 %v628
        %v631 = vmul.u32.u64.compose %v627, %v622
        %v632 = vextract.low.u32 %v631
        %v633 = vextract.high.u32 %v631
        %v634 = vmul.u32 %v627, %v618
        %v635 = vadd.s32 %v630, %v632
        %vm636 = vc.u32 %v630, %v632
        %v637 = vadd.s32 %v633, 1
        %v638 = vsel %vm636, %v637, %v633
        %v639 = vadd.s32 %v634, %v638
        %v640 = vadd.s32 %v639, 536870912
        %v641 = vshrl.u32 %v640, 30
        %v642 = vshll.u32 %v641, 30
        %v643 = vsub.s32 %v639, %v642
        %vm644 = vcmp.lt.s32.totalorder %v643, 0
        %v645 = vsub.s32 0, %v643
        %v646 = vsel %vm644, %v645, %v643
        %v647 = vclz %v646
        %v648 = vsub.s32 %v647, 2
        %vm649 = vcmp.gt.s32.totalorder 0, %v648
        %v650 = vsel %vm649, 0, %v648
        %v651 = vsub.s32 32, %v650
        %v652 = vshll.u32 %v643, %v650
        %v653 = vshrl.u32 %v635, %v651
        %v654 = vor.u32 %v652, %v653
        %v655 = vsub.s32 4294967266, %v650
        %v656 = vadd.s32 %v655, 127
        %v657 = vshll.u32 %v656, 23
        %v658 = vor.u32 4788187, %v657
        %v659 = vand.u32 2147483647, %v658
        %v661 = vcvt.s32.f32 %v654
        %v662 = vmul.f32 %v661, %v659
        %v663 = vxor.u32 %v662, 2147483648
        %v664 = vsel %vm581, %v663, %v662
        %v665 = vsub.s32 4, %v641
        %v666 = vsel %vm581, %v665, %v641
        %v667 = vsel %vm580, %v137, %v664
        %v668 = vsel %vm580, 0, %v666
        %v669 = vcosq.f32.pop %v667
        %v670 = vsinq.f32.pop %v667
        %vm671 = vweird.f32 %v137
        %v672 = vand.u32 %v668, 3
        %vm673 = vcmp.lt.s32.totalorder %v672, 2
        %vm674 = vcmp.eq.s32.totalorder %v672, 0
        %v675 = vxor.u32 %v670, 2147483648
        %v676 = vsel %vm674, %v669, %v675
        %vm677 = vcmp.eq.s32.totalorder %v672, 2
        %v678 = vxor.u32 %v669, 2147483648
        %v679 = vsel %vm677, %v678, %v670
        %v680 = vsel %vm673, %v676, %v679
        %v681 = vsel %vm671, nan, %v680
        %v682 = vmul.f32 %v362, %v681
        %v683 = vand.u32 2147483647, %v137
        %vm684 = vcmp.le.f32.partialorder %v683, 0.7853982
        %vm685 = vcmp.lt.s32.totalorder %v137, 0
        %v686 = vand.u32 %v137, 2139095040
        %v687 = vshrl.u32 %v686, 23
        %v688 = vsub.s32 %v687, 127
        %v689 = vand.u32 2147483647, %v137
        %v690 = vand.u32 %v689, 8388607
        %v691 = vor.u32 %v690, 8388608
        %v692 = vsub.s32 0, %v691
        %v693 = vadd.s32 %v688, 1
        %vm694 = vcmp.gt.s32.totalorder %v693, 0
        %v695 = vsel %vm694, %v693, 0
        %v696 = vshrl.u32 %v695, 5
        %v697 = vand.u32 %v695, 31
        %v698 = vsub.s32 32, %v697
        %v699 = vshrl.u32 683565275, %v698
        %v700 = vshll.u32 683565275, %v697
        %v701 = vshrl.u32 2475754826, %v698
        %v702 = vor.u32 %v700, %v701
        %v703 = vshll.u32 2475754826, %v697
        %v704 = vshrl.u32 2131351028, %v698
        %v705 = vor.u32 %v703, %v704
        %v706 = vshll.u32 2131351028, %v697
        %v707 = vshrl.u32 2102212464, %v698
        %v708 = vor.u32 %v706, %v707
        %v709 = vshll.u32 2102212464, %v697
        %v710 = vshrl.u32 920167782, %v698
        %v711 = vor.u32 %v709, %v710
        %v712 = vshll.u32 920167782, %v697
        %v713 = vshrl.u32 1326507024, %v698
        %v714 = vor.u32 %v712, %v713
        %vm715 = vcmp.lt.s32.totalorder %v696, 1
        %vm716 = vcmp.lt.s32.totalorder %v696, 2
        %vm717 = vcmp.lt.s32.totalorder %v696, 3
        %vm718 = vcmp.lt.s32.totalorder %v696, 4
        %v719 = vsel %vm715, %v699, %v702
        %v720 = vsel %vm718, %v708, 2102212464
        %v721 = vsel %vm717, %v705, %v720
        %v722 = vsel %vm716, %v719, %v721
        %v723 = vsel %vm715, %v702, %v705
        %v724 = vsel %vm718, %v711, 920167782
        %v725 = vsel %vm717, %v708, %v724
        %v726 = vsel %vm716, %v723, %v725
        %v727 = vsel %vm715, %v705, %v708
        %v728 = vsel %vm718, %v714, 1326507024
        %v729 = vsel %vm717, %v711, %v728
        %v730 = vsel %vm716, %v727, %v729
        %v731 = vshll.u32 %v691, 8
        %v732 = vmul.u32.u64.compose %v731, %v730
        %v733 = vextract.low.u32 %v732
        %v734 = vextract.high.u32 %v732
        %v735 = vmul.u32.u64.compose %v731, %v726
        %v736 = vextract.low.u32 %v735
        %v737 = vextract.high.u32 %v735
        %v738 = vmul.u32 %v731, %v722
        %v739 = vadd.s32 %v734, %v736
        %vm740 = vc.u32 %v734, %v736
        %v741 = vadd.s32 %v737, 1
        %v742 = vsel %vm740, %v741, %v737
        %v743 = vadd.s32 %v738, %v742
        %v744 = vadd.s32 %v743, 536870912
        %v745 = vshrl.u32 %v744, 30
        %v746 = vshll.u32 %v745, 30
        %v747 = vsub.s32 %v743, %v746
        %vm748 = vcmp.lt.s32.totalorder %v747, 0
        %v749 = vsub.s32 0, %v747
        %v750 = vsel %vm748, %v749, %v747
        %v751 = vclz %v750
        %v752 = vsub.s32 %v751, 2
        %vm753 = vcmp.gt.s32.totalorder 0, %v752
        %v754 = vsel %vm753, 0, %v752
        %v755 = vsub.s32 32, %v754
        %v756 = vshll.u32 %v747, %v754
        %v757 = vshrl.u32 %v739, %v755
        %v758 = vor.u32 %v756, %v757
        %v759 = vsub.s32 4294967266, %v754
        %v760 = vadd.s32 %v759, 127
        %v761 = vshll.u32 %v760, 23
        %v762 = vor.u32 4788187, %v761
        %v763 = vand.u32 2147483647, %v762
        %v765 = vcvt.s32.f32 %v758
        %v766 = vmul.f32 %v765, %v763
        %v767 = vxor.u32 %v766, 2147483648
        %v768 = vsel %vm685, %v767, %v766
        %v769 = vsub.s32 4, %v745
        %v770 = vsel %vm685, %v769, %v745
        %v771 = vsel %vm684, %v137, %v768
        %v772 = vsel %vm684, 0, %v770
        %v773 = vcosq.f32.pop %v771
        %v774 = vsinq.f32.pop %v771
        %vm775 = vweird.f32 %v137
        %v776 = vadd.s32 %v772, 3
        %v777 = vand.u32 %v776, 3
        %vm778 = vcmp.lt.s32.totalorder %v777, 2
        %vm779 = vcmp.eq.s32.totalorder %v777, 0
        %v780 = vxor.u32 %v774, 2147483648
        %v781 = vsel %vm779, %v773, %v780
        %vm782 = vcmp.eq.s32.totalorder %v777, 2
        %v783 = vxor.u32 %v773, 2147483648
        %v784 = vsel %vm782, %v783, %v774
        %v785 = vsel %vm778, %v781, %v784
        %v786 = vsel %vm775, nan, %v785
        %v787 = vmul.f32 %v362, %v786
        %v788 = vand.u32 2147483647, %v140
        %vm789 = vcmp.le.f32.partialorder %v788, 0.7853982
        %vm790 = vcmp.lt.s32.totalorder %v140, 0
        %v791 = vand.u32 %v140, 2139095040
        %v792 = vshrl.u32 %v791, 23
        %v793 = vsub.s32 %v792, 127
        %v794 = vand.u32 2147483647, %v140
        %v795 = vand.u32 %v794, 8388607
        %v796 = vor.u32 %v795, 8388608
        %v797 = vsub.s32 0, %v796
        %v798 = vadd.s32 %v793, 1
        %vm799 = vcmp.gt.s32.totalorder %v798, 0
        %v800 = vsel %vm799, %v798, 0
        %v801 = vshrl.u32 %v800, 5
        %v802 = vand.u32 %v800, 31
        %v803 = vsub.s32 32, %v802
        %v804 = vshrl.u32 683565275, %v803
        %v805 = vshll.u32 683565275, %v802
        %v806 = vshrl.u32 2475754826, %v803
        %v807 = vor.u32 %v805, %v806
        %v808 = vshll.u32 2475754826, %v802
        %v809 = vshrl.u32 2131351028, %v803
        %v810 = vor.u32 %v808, %v809
        %v811 = vshll.u32 2131351028, %v802
        %v812 = vshrl.u32 2102212464, %v803
        %v813 = vor.u32 %v811, %v812
        %v814 = vshll.u32 2102212464, %v802
        %v815 = vshrl.u32 920167782, %v803
        %v816 = vor.u32 %v814, %v815
        %v817 = vshll.u32 920167782, %v802
        %v818 = vshrl.u32 1326507024, %v803
        %v819 = vor.u32 %v817, %v818
        %vm820 = vcmp.lt.s32.totalorder %v801, 1
        %vm821 = vcmp.lt.s32.totalorder %v801, 2
        %vm822 = vcmp.lt.s32.totalorder %v801, 3
        %vm823 = vcmp.lt.s32.totalorder %v801, 4
        %v824 = vsel %vm820, %v804, %v807
        %v825 = vsel %vm823, %v813, 2102212464
        %v826 = vsel %vm822, %v810, %v825
        %v827 = vsel %vm821, %v824, %v826
        %v828 = vsel %vm820, %v807, %v810
        %v829 = vsel %vm823, %v816, 920167782
        %v830 = vsel %vm822, %v813, %v829
        %v831 = vsel %vm821, %v828, %v830
        %v832 = vsel %vm820, %v810, %v813
        %v833 = vsel %vm823, %v819, 1326507024
        %v834 = vsel %vm822, %v816, %v833
        %v835 = vsel %vm821, %v832, %v834
        %v836 = vshll.u32 %v796, 8
        %v837 = vmul.u32.u64.compose %v836, %v835
        %v838 = vextract.low.u32 %v837
        %v839 = vextract.high.u32 %v837
        %v840 = vmul.u32.u64.compose %v836, %v831
        %v841 = vextract.low.u32 %v840
        %v842 = vextract.high.u32 %v840
        %v843 = vmul.u32 %v836, %v827
        %v844 = vadd.s32 %v839, %v841
        %vm845 = vc.u32 %v839, %v841
        %v846 = vadd.s32 %v842, 1
        %v847 = vsel %vm845, %v846, %v842
        %v848 = vadd.s32 %v843, %v847
        %v849 = vadd.s32 %v848, 536870912
        %v850 = vshrl.u32 %v849, 30
        %v851 = vshll.u32 %v850, 30
        %v852 = vsub.s32 %v848, %v851
        %vm853 = vcmp.lt.s32.totalorder %v852, 0
        %v854 = vsub.s32 0, %v852
        %v855 = vsel %vm853, %v854, %v852
        %v856 = vclz %v855
        %v857 = vsub.s32 %v856, 2
        %vm858 = vcmp.gt.s32.totalorder 0, %v857
        %v859 = vsel %vm858, 0, %v857
        %v860 = vsub.s32 32, %v859
        %v861 = vshll.u32 %v852, %v859
        %v862 = vshrl.u32 %v844, %v860
        %v863 = vor.u32 %v861, %v862
        %v864 = vsub.s32 4294967266, %v859
        %v865 = vadd.s32 %v864, 127
        %v866 = vshll.u32 %v865, 23
        %v867 = vor.u32 4788187, %v866
        %v868 = vand.u32 2147483647, %v867
        %v870 = vcvt.s32.f32 %v863
        %v871 = vmul.f32 %v870, %v868
        %v872 = vxor.u32 %v871, 2147483648
        %v873 = vsel %vm790, %v872, %v871
        %v874 = vsub.s32 4, %v850
        %v875 = vsel %vm790, %v874, %v850
        %v876 = vsel %vm789, %v140, %v873
        %v877 = vsel %vm789, 0, %v875
        %v878 = vcosq.f32.pop %v876
        %v879 = vsinq.f32.pop %v876
        %vm880 = vweird.f32 %v140
        %v881 = vadd.s32 %v877, 3
        %v882 = vand.u32 %v881, 3
        %vm883 = vcmp.lt.s32.totalorder %v882, 2
        %vm884 = vcmp.eq.s32.totalorder %v882, 0
        %v885 = vxor.u32 %v879, 2147483648
        %v886 = vsel %vm884, %v878, %v885
        %vm887 = vcmp.eq.s32.totalorder %v882, 2
        %v888 = vxor.u32 %v878, 2147483648
        %v889 = vsel %vm887, %v888, %v879
        %v890 = vsel %vm883, %v886, %v889
        %v891 = vsel %vm880, nan, %v890
        %v892 = vmul.f32 %v578, %v891
        %v893 = vand.u32 2147483647, %v140
        %vm894 = vcmp.le.f32.partialorder %v893, 0.7853982
        %vm895 = vcmp.lt.s32.totalorder %v140, 0
        %v896 = vand.u32 %v140, 2139095040
        %v897 = vshrl.u32 %v896, 23
        %v898 = vsub.s32 %v897, 127
        %v899 = vand.u32 2147483647, %v140
        %v900 = vand.u32 %v899, 8388607
        %v901 = vor.u32 %v900, 8388608
        %v902 = vsub.s32 0, %v901
        %v903 = vadd.s32 %v898, 1
        %vm904 = vcmp.gt.s32.totalorder %v903, 0
        %v905 = vsel %vm904, %v903, 0
        %v906 = vshrl.u32 %v905, 5
        %v907 = vand.u32 %v905, 31
        %v908 = vsub.s32 32, %v907
        %v909 = vshrl.u32 683565275, %v908
        %v910 = vshll.u32 683565275, %v907
        %v911 = vshrl.u32 2475754826, %v908
        %v912 = vor.u32 %v910, %v911
        %v913 = vshll.u32 2475754826, %v907
        %v914 = vshrl.u32 2131351028, %v908
        %v915 = vor.u32 %v913, %v914
        %v916 = vshll.u32 2131351028, %v907
        %v917 = vshrl.u32 2102212464, %v908
        %v918 = vor.u32 %v916, %v917
        %v919 = vshll.u32 2102212464, %v907
        %v920 = vshrl.u32 920167782, %v908
        %v921 = vor.u32 %v919, %v920
        %v922 = vshll.u32 920167782, %v907
        %v923 = vshrl.u32 1326507024, %v908
        %v924 = vor.u32 %v922, %v923
        %vm925 = vcmp.lt.s32.totalorder %v906, 1
        %vm926 = vcmp.lt.s32.totalorder %v906, 2
        %vm927 = vcmp.lt.s32.totalorder %v906, 3
        %vm928 = vcmp.lt.s32.totalorder %v906, 4
        %v929 = vsel %vm925, %v909, %v912
        %v930 = vsel %vm928, %v918, 2102212464
        %v931 = vsel %vm927, %v915, %v930
        %v932 = vsel %vm926, %v929, %v931
        %v933 = vsel %vm925, %v912, %v915
        %v934 = vsel %vm928, %v921, 920167782
        %v935 = vsel %vm927, %v918, %v934
        %v936 = vsel %vm926, %v933, %v935
        %v937 = vsel %vm925, %v915, %v918
        %v938 = vsel %vm928, %v924, 1326507024
        %v939 = vsel %vm927, %v921, %v938
        %v940 = vsel %vm926, %v937, %v939
        %v941 = vshll.u32 %v901, 8
        %v942 = vmul.u32.u64.compose %v941, %v940
        %v943 = vextract.low.u32 %v942
        %v944 = vextract.high.u32 %v942
        %v945 = vmul.u32.u64.compose %v941, %v936
        %v946 = vextract.low.u32 %v945
        %v947 = vextract.high.u32 %v945
        %v948 = vmul.u32 %v941, %v932
        %v949 = vadd.s32 %v944, %v946
        %vm950 = vc.u32 %v944, %v946
        %v951 = vadd.s32 %v947, 1
        %v952 = vsel %vm950, %v951, %v947
        %v953 = vadd.s32 %v948, %v952
        %v954 = vadd.s32 %v953, 536870912
        %v955 = vshrl.u32 %v954, 30
        %v956 = vshll.u32 %v955, 30
        %v957 = vsub.s32 %v953, %v956
        %vm958 = vcmp.lt.s32.totalorder %v957, 0
        %v959 = vsub.s32 0, %v957
        %v960 = vsel %vm958, %v959, %v957
        %v961 = vclz %v960
        %v962 = vsub.s32 %v961, 2
        %vm963 = vcmp.gt.s32.totalorder 0, %v962
        %v964 = vsel %vm963, 0, %v962
        %v965 = vsub.s32 32, %v964
        %v966 = vshll.u32 %v957, %v964
        %v967 = vshrl.u32 %v949, %v965
        %v968 = vor.u32 %v966, %v967
        %v969 = vsub.s32 4294967266, %v964
        %v970 = vadd.s32 %v969, 127
        %v971 = vshll.u32 %v970, 23
        %v972 = vor.u32 4788187, %v971
        %v973 = vand.u32 2147483647, %v972
        %v975 = vcvt.s32.f32 %v968
        %v976 = vmul.f32 %v975, %v973
        %v977 = vxor.u32 %v976, 2147483648
        %v978 = vsel %vm895, %v977, %v976
        %v979 = vsub.s32 4, %v955
        %v980 = vsel %vm895, %v979, %v955
        %v981 = vsel %vm894, %v140, %v978
        %v982 = vsel %vm894, 0, %v980
        %v983 = vcosq.f32.pop %v981
        %v984 = vsinq.f32.pop %v981
        %vm985 = vweird.f32 %v140
        %v986 = vand.u32 %v982, 3
        %vm987 = vcmp.lt.s32.totalorder %v986, 2
        %vm988 = vcmp.eq.s32.totalorder %v986, 0
        %v989 = vxor.u32 %v984, 2147483648
        %v990 = vsel %vm988, %v983, %v989
        %vm991 = vcmp.eq.s32.totalorder %v986, 2
        %v992 = vxor.u32 %v983, 2147483648
        %v993 = vsel %vm991, %v992, %v984
        %v994 = vsel %vm987, %v990, %v993
        %v995 = vsel %vm985, nan, %v994
        %v996 = vmul.f32 %v578, %v995
        %v997 = vmul.f32 %v682, %v892
        %998 = vst [vmem:[%s118] sm:$0xff] %v997
        %v999 = vmul.f32 %v787, %v892
        %s1000 = scalar_lea.vmem %s118, 8 [#allocation4]
        %1001 = vst [vmem:[%s1000] sm:$0xff] %v999
        %s1002 = scalar_lea.vmem %s118, 16 [#allocation4]
        %1003 = vst [vmem:[%s1002] sm:$0xff] %v996
        %s1004 = sand.u32 %s56, 1
        %s1005 = sand.u32 %s56, 1
        %s1006 = smul.addr %s1005, 24
        %s1007 = scalar_lea.vmem [#allocation4], %s1006
        // Predicated region
        $region29: #{supershape_forward.1} parent=23 // pred_check
          %p1008 = pneg %p66
        $region30: #{supershape_forward.1} parent=23 // pred_check_branch
          %1010 = sbr.rel (%p1008) target = $region32
        $region31: #{supershape_forward.1} parent=23 // pred_region
          %s1011 = sadd.s32 %s18, %s17
          %s1012 = smul.addr %s1011, 8
          %s1013 = scalar_lea.vmem %s1, %s1012
          // Predicated region
          $region33: #{supershape_forward.1} parent=31 // pred_check
            _
          $region34: #{supershape_forward.1} parent=31 // pred_check_branch
            %1015 = sbr.rel (0) target = $region36
          $region35: #{supershape_forward.1} parent=31 // pred_region
            // Predicated region
            $region37: #{supershape_forward.1} parent=35 // pred_check
              _
            $region38: #{supershape_forward.1} parent=35 // pred_check_branch
              %1017 = sbr.rel (0) target = $region40
            $region39: #{supershape_forward.1} parent=35 // pred_region
              // Predicated region
              $region52: #{supershape_forward.1} parent=39 // pred_check
                _
              $region53: #{supershape_forward.1} parent=39 // pred_check_branch
                %1037 = sbr.rel (0) target = $region55
              $region54: #{supershape_forward.1} parent=39 // pred_region
                loop: start=0, step=1, limit=1
                $region56: #{supershape_forward.1} parent=54 // loop_pre_header
                  _
                $region57: #{supershape_forward.1} parent=54 // loop_header
                  %s1039 = sphi 0, %s1043
                  %p1040 = scmp.ge.s32.totalorder %s1039, 1
                  %s1044 = sphi %s1007, %s1007
                  %s1045 = sphi %s1013, %s1013
                $region58: #{supershape_forward.1} parent=54 // loop_header_branch
                  %1042 = sbr.rel (%p1040) target = $region62
                $region59: #{supershape_forward.1} parent=54 // loop_body
                  %v1046 = vld [vmem:[%s1044] sm:$0xff]
                  %1047 = vst [vmem:[%s1045] sm:$0xff] %v1046
                  %v1048 = vld [vmem:[%s1044 + $0x8] sm:$0xff]
                  %1049 = vst [vmem:[%s1045 + $0x20] sm:$0xff] %v1048
                  %v1050 = vld [vmem:[%s1044 + $0x10] sm:$0xff]
                  %1051 = vst [vmem:[%s1045 + $0x40] sm:$0xff] %v1050
                $region60: #{supershape_forward.1} parent=54 // loop_footer
                  %s1043 = sadd.s32 1, %s1039
                $region61: #{supershape_forward.1} parent=54 // loop_footer_branch
                  %1038 = sbr.rel target = $region57
                $region62: #{supershape_forward.1} parent=54 // loop_exit
                  _
              $region55: #{supershape_forward.1} parent=39 // pred_fallthru
                _
              // Predicated region
              $region63: #{supershape_forward.1} parent=39 // pred_check
                _
              $region64: #{supershape_forward.1} parent=39 // pred_check_branch
                %1053 = sbr.rel target = $region66
              $region65: #{supershape_forward.1} parent=39 // pred_region
                _
              $region66: #{supershape_forward.1} parent=39 // pred_fallthru
                _
            $region40: #{supershape_forward.1} parent=35 // pred_fallthru
              _
            // Predicated region
            $region41: #{supershape_forward.1} parent=35 // pred_check
              _
            $region42: #{supershape_forward.1} parent=35 // pred_check_branch
              %1019 = sbr.rel target = $region44
            $region43: #{supershape_forward.1} parent=35 // pred_region
              %s1021 = ssub.s32 256, 1
              loop: start=0, step=1, limit=1
              $region45: #{supershape_forward.1} parent=43 // loop_pre_header
                _
              $region46: #{supershape_forward.1} parent=43 // loop_header
                %s1023 = sphi 0, %s1027
                %p1024 = scmp.ge.s32.totalorder %s1023, 1
                %s1028 = sphi %s1007, %s1007
                %s1029 = sphi %s1013, %s1013
              $region47: #{supershape_forward.1} parent=43 // loop_header_branch
                %1026 = sbr.rel (%p1024) target = $region51
              $region48: #{supershape_forward.1} parent=43 // loop_body
                %v1030 = vld [vmem:[%s1028] sm:%s1021]
                %1031 = vst [vmem:[%s1029] sm:%s1021] %v1030
                %v1032 = vld [vmem:[%s1028 + $0x8] sm:%s1021]
                %1033 = vst [vmem:[%s1029 + $0x20] sm:%s1021] %v1032
                %v1034 = vld [vmem:[%s1028 + $0x10] sm:%s1021]
                %1035 = vst [vmem:[%s1029 + $0x40] sm:%s1021] %v1034
              $region49: #{supershape_forward.1} parent=43 // loop_footer
                %s1027 = sadd.s32 1, %s1023
              $region50: #{supershape_forward.1} parent=43 // loop_footer_branch
                %1022 = sbr.rel target = $region46
              $region51: #{supershape_forward.1} parent=43 // loop_exit
                _
            $region44: #{supershape_forward.1} parent=35 // pred_fallthru
              _
          $region36: #{supershape_forward.1} parent=31 // pred_fallthru
            _
          %1054 = vnop
        $region32: #{supershape_forward.1} parent=23 // pred_fallthru
          _
      $region24: #{supershape_forward.1} parent=5 // pred_fallthru
        _
      %p1055 = scmp.le.s32.totalorder 2, %s8
      // Predicated region
      $region67: #{supershape_forward.1} parent=5 // pred_check
        %p1056 = pneg %p1055
      $region68: #{supershape_forward.1} parent=5 // pred_check_branch
        %1058 = sbr.rel (%p1056) target = $region70
      $region69: #{supershape_forward.1} parent=5 // pred_region
        %s1059 = ssub.s32 %s8, 2
        // Predicated region
        $region71: #{supershape_forward.1} parent=69 // pred_check
          %p1060 = pneg %p72
        $region72: #{supershape_forward.1} parent=69 // pred_check_branch
          %1062 = sbr.rel (%p1060) target = $region74
        $region73: #{supershape_forward.1} parent=69 // pred_region
          %s1063 = sand.u32 %s57, 1
          %s1064 = sand.u32 %s57, 1
          %s1065 = smul.addr %s1064, 24
          %s1066 = scalar_lea.vmem [#allocation4], %s1065
        $region74: #{supershape_forward.1} parent=69 // pred_fallthru
          _
      $region70: #{supershape_forward.1} parent=5 // pred_fallthru
        _
    $region6: #{supershape_forward.1} parent=1 // loop_footer
      %s12 = sadd.s32 1, %s8
    $region7: #{supershape_forward.1} parent=1 // loop_footer_branch
      %7 = sbr.rel target = $region3
    $region8: #{supershape_forward.1} parent=1 // loop_exit
      _
    %1067 = vsyncpa [#allocation3], 1
    %s1068 = scalar_lea.sflag [#allocation3], 1
    %1069 = vsyncpa %s1068, 1

</llo_original>
